<compile_context>
chip_gen: v6e
topology: v6e:2x2x1
jax: 0.10.0
libtpu: 0.0.40
codegen_flags: <defaults>
</compile_context>

<pallas_src>
import functools

import jax
import jax.numpy as jnp
from jax import lax
from jax.experimental import pallas as pl
from jax.experimental.pallas import tpu as pltpu


# ----------------------------- helpers --------------------------------------

# Explicit VMEM budget: above the 32 MiB scoped default, still safe on v7x
# (64 MiB physical per TC).
# TODO(synk): on v5e/v6e (128 MiB VMEM) this can be raised toward ~96 MiB
# together with larger N-tiles.
_VMEM_LIMIT_BYTES = 48 * 1024 * 1024


def _cparams(*sem):
    return pltpu.CompilerParams(
        dimension_semantics=sem,
        vmem_limit_bytes=_VMEM_LIMIT_BYTES,
    )


def _choose_tile(n, target):
    """Largest multiple-of-8 tile <= target that evenly divides n (else n)."""
    if n <= target:
        return n
    for t in range(target, 7, -1):
        if n % t == 0 and t % 8 == 0:
            return t
    return n


# ----------------------------- kernels --------------------------------------


def _qkv_kernel(x_ref, w_ref, o_ref):
    # x_ref: (1, TN, C) f32; w_ref: (C, 3C) bf16 resident; o_ref: (1, TN, 3C) bf16.
    xb = x_ref[0].astype(w_ref.dtype)         # cast in-vreg; f32 MXU accumulation
    o_ref[0] = jnp.dot(
        xb, w_ref[...], preferred_element_type=jnp.float32
    ).astype(o_ref.dtype)


def _attn_proj_kernel(q_ref, k_ref, v_ref, wp_ref, bp_ref, o_ref, *, num_heads):
    """Attention for one (batch, query-tile) step, fused with the output proj.

    q_ref : (1, TQ, C)  query tile, all heads (scale folded into w_qkv Q cols)
    k_ref : (1, N,  C)  all keys, all heads   (resident across query tiles)
    v_ref : (1, N,  C)  all values, all heads (resident across query tiles)
    wp_ref: (C, C)      output-projection weight, resident
    bp_ref: (1, C)      output-projection bias
    o_ref : (1, TQ, C)  projected output tile (one lane-dense store)
    """
    H = num_heads
    TQ, C = q_ref.shape[1], q_ref.shape[2]
    D = C // H

    def head_major(ref):
        # (seq, C) window -> (H, seq, D): lane-tile-aligned slices (D is a
        # multiple of 128 here) + a leading-axis stack, i.e. no lane/sublane
        # relayout.  Everything downstream is head-batched on the MXU.
        # TODO(synk): for D < 128 use 128-wide head-pair slices instead.
        return jnp.stack(
            [ref[0, :, h * D:(h + 1) * D] for h in range(H)], axis=0
        )

    q = head_major(q_ref)                      # (H, TQ, D) bf16
    k = head_major(k_ref)                      # (H, N,  D) bf16
    v = head_major(v_ref)                      # (H, N,  D) bf16

    # Head-batched q @ k^T: contract D directly (no materialized k transpose).
    s = lax.dot_general(
        q, k, (((2,), (2,)), ((0,), (0,))), preferred_element_type=jnp.float32
    )                                          # (H, TQ, N) f32

    # Softmax statistics stay in f32 (v5e has no bf16 VPU/EUP).
    s = s - jnp.max(s, axis=-1, keepdims=True)
    p = jnp.exp(s)
    denom = jnp.sum(p, axis=-1, keepdims=True)  # (H, TQ, 1) f32

    # Deferred normalization: un-normalized p @ v, then multiply by 1/denom.
    o = lax.dot_general(
        p.astype(v.dtype), v, (((2,), (1,)), ((0,), (0,))),
        preferred_element_type=jnp.float32,
    )                                          # (H, TQ, D) f32
    o = o * pl.reciprocal(denom, approx=True)  # EUP approx; fine at 1e-2 tol

    # Merge heads back to a lane-dense (TQ, C) tile and fuse the output
    # projection so the attention output never round-trips through HBM.
    o = jnp.concatenate([o[h] for h in range(H)], axis=-1)       # (TQ, C) f32
    y = jnp.dot(
        o.astype(wp_ref.dtype), wp_ref[...], preferred_element_type=jnp.float32
    )                                                            # (TQ, C) f32
    o_ref[0] = (y + bp_ref[...].astype(jnp.float32)).astype(o_ref.dtype)


# ----------------------------- wrappers -------------------------------------


def _qkv_proj(x, w_qkv):
    B, N, C = x.shape
    tn = _choose_tile(N, 512)                  # 512-row tiles ~85% of HBM roofline
    return pl.pallas_call(
        _qkv_kernel,
        out_shape=jax.ShapeDtypeStruct((B, N, 3 * C), w_qkv.dtype),
        grid=(B, N // tn),
        in_specs=[
            pl.BlockSpec((1, tn, C), lambda b, i: (b, i, 0)),
            pl.BlockSpec((C, 3 * C), lambda b, i: (0, 0)),     # weight resident
        ],
        out_specs=pl.BlockSpec((1, tn, 3 * C), lambda b, i: (b, i, 0)),
        compiler_params=_cparams("parallel", "parallel"),
    )(x, w_qkv)


def _attn_out_proj(qkv, w_proj, b_proj, *, num_heads, out_dtype):
    # qkv: (B, N, 3C) laid out as [Q heads | K heads | V heads] along last dim.
    B, N, C3 = qkv.shape
    C = C3 // 3
    tq = _choose_tile(N, 256)                  # query-tile axis: >1 parallel step / batch
    kern = functools.partial(_attn_proj_kernel, num_heads=num_heads)

    return pl.pallas_call(
        kern,
        out_shape=jax.ShapeDtypeStruct((B, N, C), out_dtype),
        grid=(B, N // tq),
        in_specs=[
            pl.BlockSpec((1, tq, C), lambda b, i: (b, i, 0)),  # Q cols, query tile
            pl.BlockSpec((1, N, C), lambda b, i: (b, 0, 1)),   # K cols, resident over i
            pl.BlockSpec((1, N, C), lambda b, i: (b, 0, 2)),   # V cols, resident over i
            pl.BlockSpec((C, C), lambda b, i: (0, 0)),         # w_proj resident
            pl.BlockSpec((1, C), lambda b, i: (0, 0)),         # b_proj resident
        ],
        out_specs=pl.BlockSpec((1, tq, C), lambda b, i: (b, i, 0)),
        compiler_params=_cparams("parallel", "parallel"),
    )(qkv, qkv, qkv, w_proj, b_proj)


def prepare_params(w_qkv, w_proj, b_proj, *, num_heads, param_dtype=jnp.bfloat16):
    """One-time parameter prep (do at init time, not per forward call):
    - fold the softmax scale into the Q columns of w_qkv (exactly equivalent:
      softmax((q * scale) @ k^T) == softmax(scale * (q @ k^T))),
    - cast the big matmul weights to bf16 (MXU operands; accumulation is f32).
    """
    C = w_qkv.shape[0]
    D = C // num_heads
    scale = D ** (-0.5)                        # qk_scale=None default
    w_qkv = w_qkv.at[:, :C].multiply(scale)
    return (w_qkv.astype(param_dtype),
            w_proj.astype(param_dtype),
            b_proj.astype(jnp.float32))


def attention_forward(x, w_qkv_scaled, w_proj, b_proj, *, num_heads):
    """Forward pass matching Attention.forward (qkv_bias=False, dropouts=0)."""
    qkv = _qkv_proj(x, w_qkv_scaled)           # (B, N, 3C) bf16, scale pre-folded
    return _attn_out_proj(qkv, w_proj, b_proj,
                          num_heads=num_heads, out_dtype=x.dtype)


# ----------------------------- reference ------------------------------------


def _reference(x, w_qkv, w_proj, b_proj, num_heads):
    B, N, C = x.shape
    H = num_heads
    D = C // H
    scale = D ** (-0.5)
    qkv = x @ w_qkv
    qkv = qkv.reshape(B, N, 3, H, D).transpose(2, 0, 3, 1, 4)
    q, k, v = qkv[0], qkv[1], qkv[2]
    attn = jnp.einsum("bhqd,bhkd->bhqk", q, k) * scale
    attn = jax.nn.softmax(attn, axis=-1)
    o = jnp.einsum("bhqk,bhkd->bhqd", attn, v)
    o = o.transpose(0, 2, 1, 3).reshape(B, N, C)
    return o @ w_proj + b_proj


# ------------------------------- main ---------------------------------------


if __name__ == "__main__":
    # Small but TPU-layout-friendly shapes (C and head_dim multiples of 128).
    B, N, C = 2, 16, 256
    num_heads = 2  # head_dim = 128

    key = jax.random.PRNGKey(0)
    kx, kq, kp, kb = jax.random.split(key, 4)

    x = jax.random.normal(kx, (B, N, C), dtype=jnp.float32)
    # qkv: nn.Linear(dim, dim*3, bias=False) -> stored as (in=C, out=3C)
    w_qkv = 0.02 * jax.random.normal(kq, (C, 3 * C), dtype=jnp.float32)
    # proj: nn.Linear(dim, dim) with bias -> stored as (in=C, out=C), bias (1, C)
    w_proj = 0.02 * jax.random.normal(kp, (C, C), dtype=jnp.float32)
    b_proj = 0.02 * jax.random.normal(kb, (1, C), dtype=jnp.float32)

    params = prepare_params(w_qkv, w_proj, b_proj, num_heads=num_heads)
    out = attention_forward(x, *params, num_heads=num_heads)
    out = jax.block_until_ready(out)

    ref = _reference(x, w_qkv, w_proj, b_proj, num_heads)
    assert out.shape == (B, N, C)
    max_err = float(jnp.max(jnp.abs(out - ref)))
    assert jnp.allclose(out, ref, atol=2e-2, rtol=2e-2), max_err
    print("KERNEL_OK")
</pallas_src>

<mosaic_0001>
module attributes {stable_mosaic.version = 11 : i64} {
  func.func @_qkv_kernel(%arg0: i32, %arg1: i32, %arg2: memref<1x16x256xf32, #tpu.memory_space<vmem>>, %arg3: memref<256x768xbf16, #tpu.memory_space<vmem>>, %arg4: memref<1x16x768xbf16, #tpu.memory_space<vmem>>) attributes {dimension_semantics = [#tpu.dimension_semantics<parallel>, #tpu.dimension_semantics<parallel>], iteration_bounds = array<i64: 2, 1>, scalar_prefetch = 0 : i64, scratch_operands = 0 : i64, tpu.core_type = #tpu.core_type<tc>, window_params = [{transform_indices = @transform_0, window_bounds = array<i64: 1, 16, 256>}, {pipeline_mode = #tpu.pipeline_mode<synchronous>, transform_indices = @transform_1, window_bounds = array<i64: 256, 768>}, {transform_indices = @transform_2, window_bounds = array<i64: 1, 16, 768>}]} {
    %c0 = arith.constant 0 : index
    %c0_0 = arith.constant 0 : index
    %c0_1 = arith.constant 0 : index
    %0 = vector.load %arg2[%c0, %c0_0, %c0_1] : memref<1x16x256xf32, #tpu.memory_space<vmem>>, vector<1x16x256xf32>
    %1 = vector.shape_cast %0 : vector<1x16x256xf32> to vector<16x256xf32>
    %2 = arith.truncf %1 : vector<16x256xf32> to vector<16x256xbf16>
    %c0_2 = arith.constant 0 : index
    %c0_3 = arith.constant 0 : index
    %3 = vector.load %arg3[%c0_2, %c0_3] : memref<256x768xbf16, #tpu.memory_space<vmem>>, vector<256x768xbf16>
    %cst = arith.constant dense<0.000000e+00> : vector<16x768xf32>
    %4 = tpu.matmul %2, %3, %cst {dimension_numbers = #tpu.dot_dimension_numbers<[1], [0], [0], [1], [0, 0, 1, 1], [], []>} : vector<16x256xbf16>, vector<256x768xbf16>, vector<16x768xf32> -> vector<16x768xf32>
    %5 = arith.truncf %4 : vector<16x768xf32> to vector<16x768xbf16>
    %c0_4 = arith.constant 0 : index
    %c0_5 = arith.constant 0 : index
    %c0_6 = arith.constant 0 : index
    %6 = vector.load %arg4[%c0_4, %c0_5, %c0_6] : memref<1x16x768xbf16, #tpu.memory_space<vmem>>, vector<1x16x768xbf16>
    %7 = vector.shape_cast %6 : vector<1x16x768xbf16> to vector<16x768xbf16>
    %8 = vector.shape_cast %5 : vector<16x768xbf16> to vector<1x16x768xbf16>
    tpu.vector_store %arg4[%c0_4, %c0_5, %c0_6], %8 {strides = array<i32>} : memref<1x16x768xbf16, #tpu.memory_space<vmem>>, vector<1x16x768xbf16>,
    return
  }
  func.func @transform_0(%arg0: i32, %arg1: i32) -> (i32, i32, i32) {
    %c0_i32 = arith.constant 0 : i32
    %c0_i32_0 = arith.constant 0 : i32
    return %arg0, %arg1, %c0_i32 : i32, i32, i32
  }
  func.func @transform_1(%arg0: i32, %arg1: i32) -> (i32, i32) {
    %c0_i32 = arith.constant 0 : i32
    %c0_i32_0 = arith.constant 0 : i32
    %c0_i32_1 = arith.constant 0 : i32
    return %c0_i32, %c0_i32_0 : i32, i32
  }
  func.func @transform_2(%arg0: i32, %arg1: i32) -> (i32, i32, i32) {
    %c0_i32 = arith.constant 0 : i32
    %c0_i32_0 = arith.constant 0 : i32
    return %arg0, %arg1, %c0_i32 : i32, i32, i32
  }
}

</mosaic_0001>

<llo_original>
// kernel: tpu_custom_call.1
$region0: #{tpu_custom_call.1}
  #allocation0 [shape = 'u32[]', space=smem, size = 0x4, offset = 0x4, fixed_abs, tag = 'smem constant byte address 0x4 - core index']
  #allocation1 [shape = 'u32[144,128]{1,0:T(1,128)}', space=vmem, size = 0x12000, scoped, tag = 'internal scratch']
  %s0 = inlined_call_operand.hbm [shape: f32[2,16,256], index: 0, kind: input, shape index: {}]
  %s1 = inlined_call_operand.hbm [shape: bf16[256,768], index: 1, kind: input, shape index: {}]
  %s2 = inlined_call_operand.hbm [shape: bf16[2,16,768], index: 2, kind: output, shape index: {}]
  %s3 = sld [smem:[#allocation0]]
  $region49: #{tpu_custom_call.1} parent=0
    _
  %s5 = ssub.s32 1, %s3
  %s6 = scalar_select 0, %s5, %s3
  $region1: #{tpu_custom_call.1} parent=0
    #allocation2 [shape = 'u8[32768]{0}', space=vmem, size = 0x8000, scoped, tag = 'input window, operand 0']
    #allocation3 [shape = 's32[2]{0}', space=sflag, size = 0x8, scoped, tag = 'scoped memory for tpu_custom_call.1']
    #allocation4 [shape = 's32[2]{0}', space=sflag, size = 0x8, scoped, tag = 'scoped memory for tpu_custom_call.1']
    #allocation5 [shape = 'u8[393216]{0}', space=vmem, size = 0x60000, scoped, tag = 'input window, operand 1, single buffered']
    #allocation6 [shape = 's32[1]{0}', space=sflag, size = 0x4, scoped, tag = 'scoped memory for tpu_custom_call.1']
    #allocation7 [shape = 'u8[49152]{0}', space=vmem, size = 0xc000, scoped, tag = 'output window, operand 0']
    %7 = vsyncpa [#allocation3], 0
    %s8 = scalar_lea.sflag [#allocation3], 1
    %9 = vsyncpa %s8, 0
    %10 = vsyncpa [#allocation6], 0
    %11 = vsyncpa [#allocation4], 0
    %s12 = scalar_lea.sflag [#allocation4], 1
    %13 = vsyncpa %s12, 0
    loop: start=0, step=1, limit=4
    $region2: #{tpu_custom_call.1} parent=1 // loop_pre_header
      _
    $region3: #{tpu_custom_call.1} parent=1 // loop_header
      %s15 = sphi 0, %s19
      %p16 = scmp.ge.s32.totalorder %s15, 4
      %s22 = sphi 0, %s34
      %s23 = sphi 0, %s30
      %s24 = sphi 0, %s22
      %s25 = sphi 0, %s23
      %s26 = sphi 0, %s24
      %s27 = sphi 0, %s25
      %s39 = sphi 0, %s41
      %s42 = sphi 0, %s39
      %s43 = sphi 0, %s42
      %s59 = sphi 0, %s43
      %s63 = sphi 0, %s63
      %s65 = sphi 0, %s63
      %s66 = sphi 0, %s65
      %s80 = sphi 0, %s66
      %s88 = sphi 0, %s90
      %s91 = sphi 0, %s88
      %s92 = sphi 0, %s91
      %s108 = sphi 0, %s92
    $region4: #{tpu_custom_call.1} parent=1 // loop_header_branch
      %18 = sbr.rel (%p16) target = $region8
    $region5: #{tpu_custom_call.1} parent=1 // loop_body
      %s20 = ssub.s32 %s15, 1
      %s21 = ssub.s32 %s15, 2
      %s28 = sadd.s32 1, %s23
      %p29 = scmp.ge.s32.totalorder %s28, 1
      %s30 = scalar_select %p29, 0, %s28
      %s31 = sadd.s32 1, %s22
      %s32 = scalar_select %p29, %s31, %s22
      %p33 = scmp.ge.s32.totalorder %s32, 2
      %s34 = scalar_select %p33, 0, %s32
      %s35 = ssub.s32 %s22, %s34
      %s36 = ssub.s32 %s23, %s30
      %s37 = sor.u32 %s35, %s36
      %p38 = scmp.eq.s32.totalorder %s37, 0
      %s40 = sadd.s32 %s39, 1
      %s41 = scalar_select %p38, %s39, %s40
      %p44 = pneg %p38
      %p45 = scmp.eq.s32.totalorder %s15, 1
      %p46 = por %p44, %p45
      %p47 = scmp.ne.s32.totalorder %s39, %s42
      %p48 = scmp.eq.s32.totalorder %s15, 0
      %p49 = por %p47, %p48
      %p50 = scmp.ne.s32.totalorder %s39, %s42
      %p51 = scmp.eq.s32.totalorder %s20, 1
      %p52 = por %p50, %p51
      %p53 = scmp.ne.s32.totalorder %s42, %s43
      %p54 = scmp.eq.s32.totalorder %s20, 0
      %p55 = por %p53, %p54
      %p56 = scmp.ne.s32.totalorder %s42, %s43
      %p57 = scmp.eq.s32.totalorder %s21, 1
      %p58 = por %p56, %p57
      %p60 = scmp.ne.s32.totalorder %s43, %s59
      %p61 = scmp.eq.s32.totalorder %s21, 0
      %p62 = por %p60, %p61
      %s64 = sadd.s32 %s63, 1
      %p67 = scmp.eq.s32.totalorder %s15, 1
      %p68 = scmp.ne.s32.totalorder %s63, %s65
      %p69 = scmp.eq.s32.totalorder %s15, 0
      %p70 = por %p68, %p69
      %p71 = scmp.ne.s32.totalorder %s63, %s65
      %p72 = scmp.eq.s32.totalorder %s20, 1
      %p73 = por %p71, %p72
      %p74 = scmp.ne.s32.totalorder %s65, %s66
      %p75 = scmp.eq.s32.totalorder %s20, 0
      %p76 = por %p74, %p75
      %p77 = scmp.ne.s32.totalorder %s65, %s66
      %p78 = scmp.eq.s32.totalorder %s21, 1
      %p79 = por %p77, %p78
      %p81 = scmp.ne.s32.totalorder %s66, %s80
      %p82 = scmp.eq.s32.totalorder %s21, 0
      %p83 = por %p81, %p82
      %s84 = ssub.s32 %s22, %s34
      %s85 = ssub.s32 %s23, %s30
      %s86 = sor.u32 %s84, %s85
      %p87 = scmp.eq.s32.totalorder %s86, 0
      %s89 = sadd.s32 %s88, 1
      %s90 = scalar_select %p87, %s88, %s89
      %p93 = pneg %p87
      %p94 = scmp.eq.s32.totalorder %s15, 1
      %p95 = por %p93, %p94
      %p96 = scmp.ne.s32.totalorder %s88, %s91
      %p97 = scmp.eq.s32.totalorder %s15, 0
      %p98 = por %p96, %p97
      %p99 = scmp.ne.s32.totalorder %s88, %s91
      %p100 = scmp.eq.s32.totalorder %s20, 1
      %p101 = por %p99, %p100
      %p102 = scmp.ne.s32.totalorder %s91, %s92
      %p103 = scmp.eq.s32.totalorder %s20, 0
      %p104 = por %p102, %p103
      %p105 = scmp.ne.s32.totalorder %s91, %s92
      %p106 = scmp.eq.s32.totalorder %s21, 1
      %p107 = por %p105, %p106
      %p109 = scmp.ne.s32.totalorder %s92, %s108
      %p110 = scmp.eq.s32.totalorder %s21, 0
      %p111 = por %p109, %p110
      %p112 = scmp.le.s32.totalorder 1, %s15
      %p113 = scmp.lt.s32.totalorder %s15, 3
      %p114 = pnand %p112, %p113
      %p115 = pneg %p114
      // Predicated region
      $region9: #{tpu_custom_call.1} parent=5 // pred_check
        _
      $region10: #{tpu_custom_call.1} parent=5 // pred_check_branch
        %117 = sbr.rel (%p114) target = $region12
      $region11: #{tpu_custom_call.1} parent=5 // pred_region
        %s118 = ssub.s32 %s15, 1
        // Predicated region
        $region13: #{tpu_custom_call.1} parent=11 // pred_check
          %p119 = pneg %p76
        $region14: #{tpu_custom_call.1} parent=11 // pred_check_branch
          %121 = sbr.rel (%p119) target = $region16
        $region15: #{tpu_custom_call.1} parent=11 // pred_region
          %s123 = ssub.s32 12288, 12288
          %124 = vsyncadd [#allocation6], %s123
          %s125 = sshll.u32 [#allocation5], 4
          %s126 = int_to_ptr.vmem [resolvable:$true] %s125
          %131 = dma.hbm_to_vmem [thread:$0]  %s1, 12288, %s126, [#allocation6], 384, 384, 24
        $region16: #{tpu_custom_call.1} parent=11 // pred_fallthru
          _
      $region12: #{tpu_custom_call.1} parent=5 // pred_fallthru
        _
      %p132 = scmp.lt.s32.totalorder %s15, 2
      // Predicated region
      $region17: #{tpu_custom_call.1} parent=5 // pred_check
        %p133 = pneg %p132
      $region18: #{tpu_custom_call.1} parent=5 // pred_check_branch
        %135 = sbr.rel (%p133) target = $region20
      $region19: #{tpu_custom_call.1} parent=5 // pred_region
        // Predicated region
        $region21: #{tpu_custom_call.1} parent=19 // pred_check
          %p136 = pneg %p49
        $region22: #{tpu_custom_call.1} parent=19 // pred_check_branch
          %138 = sbr.rel (%p136) target = $region24
        $region23: #{tpu_custom_call.1} parent=19 // pred_region
          %s139 = sand.u32 %s39, 1
          %s140 = scalar_lea.sflag [#allocation3], %s139
          %s141 = sand.u32 %s39, 1
          %s142 = smul.addr %s141, 32
          %s143 = scalar_lea.vmem [#allocation2], %s142
          %s144 = smul.u32 2, %s23
          %s146 = ssub.s32 512, 512
          %147 = vsyncadd %s140, %s146
          %s148 = smul.addr %s144, 2
          %s149 = smul.addr %s22, 4
          %s150 = sadd.s32 %s148, %s149
          %s151 = smul.addr %s150, 128
          %s152 = scalar_lea.hbm %s0, %s151
          %s153 = sshll.u32 %s143, 4
          %s154 = int_to_ptr.vmem [resolvable:$true] %s153
          %159 = dma.hbm_to_vmem [thread:$0]  %s152, 512, %s154, %s140, 256, 256, 16
        $region24: #{tpu_custom_call.1} parent=19 // pred_fallthru
          _
      $region20: #{tpu_custom_call.1} parent=5 // pred_fallthru
        _
      %p160 = scmp.le.s32.totalorder 1, %s15
      %p161 = scmp.lt.s32.totalorder %s15, 3
      %p162 = pnand %p160, %p161
      %p163 = pneg %p162
      // Predicated region
      $region25: #{tpu_custom_call.1} parent=5 // pred_check
        _
      $region26: #{tpu_custom_call.1} parent=5 // pred_check_branch
        %165 = sbr.rel (%p162) target = $region28
      $region27: #{tpu_custom_call.1} parent=5 // pred_region
        %s166 = ssub.s32 %s15, 1
        %s167 = sand.u32 %s42, 1
        %s168 = scalar_lea.sflag [#allocation3], %s167
        %s169 = sand.u32 %s42, 1
        %s170 = smul.addr %s169, 32
        %s171 = scalar_lea.vmem [#allocation2], %s170
        // Predicated region
        $region29: #{tpu_custom_call.1} parent=27 // pred_check
          %p172 = pneg %p55
        $region30: #{tpu_custom_call.1} parent=27 // pred_check_branch
          %174 = sbr.rel (%p172) target = $region32
        $region31: #{tpu_custom_call.1} parent=27 // pred_region
          %175 = dma.done %s168, 512
        $region32: #{tpu_custom_call.1} parent=27 // pred_fallthru
          _
        // Predicated region
        $region33: #{tpu_custom_call.1} parent=27 // pred_check
          %p176 = pneg %p76
        $region34: #{tpu_custom_call.1} parent=27 // pred_check_branch
          %178 = sbr.rel (%p176) target = $region36
        $region35: #{tpu_custom_call.1} parent=27 // pred_region
          %179 = dma.done [#allocation6], 12288
        $region36: #{tpu_custom_call.1} parent=27 // pred_fallthru
          _
        %s180 = sand.u32 %s42, 1
        %s181 = scalar_lea.sflag [#allocation3], %s180
        %s182 = sand.u32 %s42, 1
        %s183 = smul.addr %s182, 32
        %s184 = scalar_lea.vmem [#allocation2], %s183
        %p185 = pneg %p55
        %p186 = pneg %p52
        %p187 = pneg %p76
        %p188 = pneg %p73
        %p189 = pneg %p104
        %p190 = pneg %p101
        %s191 = sand.u32 %s91, 1
        %s192 = scalar_lea.sflag [#allocation4], %s191
        %s193 = sand.u32 %s91, 1
        %s194 = smul.addr %s193, 48
        %s195 = scalar_lea.vmem [#allocation7], %s194
        %s196 = smul.u32 2, %s25
        %s197 = smul.u32 2, %s25
        %v198 = vld [vmem:[%s171] sm:$0xff]
        %v199 = vld [vmem:[%s171 + $0x8] sm:$0xff]
        %v200 = vld [vmem:[%s171 + $0x10] sm:$0xff]
        %v201 = vld [vmem:[%s171 + $0x18] sm:$0xff]
        %v202 = vpack.c.bf16 %v200, %v198
        %v203 = vpack.c.bf16 %v201, %v199
        %v204 = vld [vmem:[#allocation5] sm:$0xff]
        %v205 = vld [vmem:[#allocation5 + $0x8] sm:$0xff]
        %v206 = vld [vmem:[#allocation5 + $0x10] sm:$0xff]
        %v207 = vld [vmem:[#allocation5 + $0x18] sm:$0xff]
        %v208 = vld [vmem:[#allocation5 + $0x20] sm:$0xff]
        %v209 = vld [vmem:[#allocation5 + $0x28] sm:$0xff]
        %v210 = vld [vmem:[#allocation5 + $0x30] sm:$0xff]
        %v211 = vld [vmem:[#allocation5 + $0x38] sm:$0xff]
        %v212 = vld [vmem:[#allocation5 + $0x40] sm:$0xff]
        %v213 = vld [vmem:[#allocation5 + $0x48] sm:$0xff]
        %v214 = vld [vmem:[#allocation5 + $0x50] sm:$0xff]
        %v215 = vld [vmem:[#allocation5 + $0x58] sm:$0xff]
        %v216 = vld [vmem:[#allocation5 + $0x60] sm:$0xff]
        %v217 = vld [vmem:[#allocation5 + $0x68] sm:$0xff]
        %v218 = vld [vmem:[#allocation5 + $0x70] sm:$0xff]
        %v219 = vld [vmem:[#allocation5 + $0x78] sm:$0xff]
        %v220 = vld [vmem:[#allocation5 + $0x80] sm:$0xff]
        %v221 = vld [vmem:[#allocation5 + $0x88] sm:$0xff]
        %v222 = vld [vmem:[#allocation5 + $0x90] sm:$0xff]
        %v223 = vld [vmem:[#allocation5 + $0x98] sm:$0xff]
        %v224 = vld [vmem:[#allocation5 + $0xa0] sm:$0xff]
        %v225 = vld [vmem:[#allocation5 + $0xa8] sm:$0xff]
        %v226 = vld [vmem:[#allocation5 + $0xb0] sm:$0xff]
        %v227 = vld [vmem:[#allocation5 + $0xb8] sm:$0xff]
        %v228 = vld [vmem:[#allocation5 + $0xc0] sm:$0xff]
        %v229 = vld [vmem:[#allocation5 + $0xc8] sm:$0xff]
        %v230 = vld [vmem:[#allocation5 + $0xd0] sm:$0xff]
        %v231 = vld [vmem:[#allocation5 + $0xd8] sm:$0xff]
        %v232 = vld [vmem:[#allocation5 + $0xe0] sm:$0xff]
        %v233 = vld [vmem:[#allocation5 + $0xe8] sm:$0xff]
        %v234 = vld [vmem:[#allocation5 + $0xf0] sm:$0xff]
        %v235 = vld [vmem:[#allocation5 + $0xf8] sm:$0xff]
        %v236 = vld [vmem:[#allocation5 + $0x100] sm:$0xff]
        %v237 = vld [vmem:[#allocation5 + $0x108] sm:$0xff]
        %v238 = vld [vmem:[#allocation5 + $0x110] sm:$0xff]
        %v239 = vld [vmem:[#allocation5 + $0x118] sm:$0xff]
        %v240 = vld [vmem:[#allocation5 + $0x120] sm:$0xff]
        %v241 = vld [vmem:[#allocation5 + $0x128] sm:$0xff]
        %v242 = vld [vmem:[#allocation5 + $0x130] sm:$0xff]
        %v243 = vld [vmem:[#allocation5 + $0x138] sm:$0xff]
        %v244 = vld [vmem:[#allocation5 + $0x140] sm:$0xff]
        %v245 = vld [vmem:[#allocation5 + $0x148] sm:$0xff]
        %v246 = vld [vmem:[#allocation5 + $0x150] sm:$0xff]
        %v247 = vld [vmem:[#allocation5 + $0x158] sm:$0xff]
        %v248 = vld [vmem:[#allocation5 + $0x160] sm:$0xff]
        %v249 = vld [vmem:[#allocation5 + $0x168] sm:$0xff]
        %v250 = vld [vmem:[#allocation5 + $0x170] sm:$0xff]
        %v251 = vld [vmem:[#allocation5 + $0x178] sm:$0xff]
        %v252 = vld [vmem:[#allocation5 + $0x180] sm:$0xff]
        %v253 = vld [vmem:[#allocation5 + $0x188] sm:$0xff]
        %v254 = vld [vmem:[#allocation5 + $0x190] sm:$0xff]
        %v255 = vld [vmem:[#allocation5 + $0x198] sm:$0xff]
        %v256 = vld [vmem:[#allocation5 + $0x1a0] sm:$0xff]
        %v257 = vld [vmem:[#allocation5 + $0x1a8] sm:$0xff]
        %v258 = vld [vmem:[#allocation5 + $0x1b0] sm:$0xff]
        %v259 = vld [vmem:[#allocation5 + $0x1b8] sm:$0xff]
        %v260 = vld [vmem:[#allocation5 + $0x1c0] sm:$0xff]
        %v261 = vld [vmem:[#allocation5 + $0x1c8] sm:$0xff]
        %v262 = vld [vmem:[#allocation5 + $0x1d0] sm:$0xff]
        %v263 = vld [vmem:[#allocation5 + $0x1d8] sm:$0xff]
        %v264 = vld [vmem:[#allocation5 + $0x1e0] sm:$0xff]
        %v265 = vld [vmem:[#allocation5 + $0x1e8] sm:$0xff]
        %v266 = vld [vmem:[#allocation5 + $0x1f0] sm:$0xff]
        %v267 = vld [vmem:[#allocation5 + $0x1f8] sm:$0xff]
        %v268 = vld [vmem:[#allocation5 + $0x200] sm:$0xff]
        %v269 = vld [vmem:[#allocation5 + $0x208] sm:$0xff]
        %v270 = vld [vmem:[#allocation5 + $0x210] sm:$0xff]
        %v271 = vld [vmem:[#allocation5 + $0x218] sm:$0xff]
        %v272 = vld [vmem:[#allocation5 + $0x220] sm:$0xff]
        %v273 = vld [vmem:[#allocation5 + $0x228] sm:$0xff]
        %v274 = vld [vmem:[#allocation5 + $0x230] sm:$0xff]
        %v275 = vld [vmem:[#allocation5 + $0x238] sm:$0xff]
        %v276 = vld [vmem:[#allocation5 + $0x240] sm:$0xff]
        %v277 = vld [vmem:[#allocation5 + $0x248] sm:$0xff]
        %v278 = vld [vmem:[#allocation5 + $0x250] sm:$0xff]
        %v279 = vld [vmem:[#allocation5 + $0x258] sm:$0xff]
        %v280 = vld [vmem:[#allocation5 + $0x260] sm:$0xff]
        %v281 = vld [vmem:[#allocation5 + $0x268] sm:$0xff]
        %v282 = vld [vmem:[#allocation5 + $0x270] sm:$0xff]
        %v283 = vld [vmem:[#allocation5 + $0x278] sm:$0xff]
        %v284 = vld [vmem:[#allocation5 + $0x280] sm:$0xff]
        %v285 = vld [vmem:[#allocation5 + $0x288] sm:$0xff]
        %v286 = vld [vmem:[#allocation5 + $0x290] sm:$0xff]
        %v287 = vld [vmem:[#allocation5 + $0x298] sm:$0xff]
        %v288 = vld [vmem:[#allocation5 + $0x2a0] sm:$0xff]
        %v289 = vld [vmem:[#allocation5 + $0x2a8] sm:$0xff]
        %v290 = vld [vmem:[#allocation5 + $0x2b0] sm:$0xff]
        %v291 = vld [vmem:[#allocation5 + $0x2b8] sm:$0xff]
        %v292 = vld [vmem:[#allocation5 + $0x2c0] sm:$0xff]
        %v293 = vld [vmem:[#allocation5 + $0x2c8] sm:$0xff]
        %v294 = vld [vmem:[#allocation5 + $0x2d0] sm:$0xff]
        %v295 = vld [vmem:[#allocation5 + $0x2d8] sm:$0xff]
        %v296 = vld [vmem:[#allocation5 + $0x2e0] sm:$0xff]
        %v297 = vld [vmem:[#allocation5 + $0x2e8] sm:$0xff]
        %v298 = vld [vmem:[#allocation5 + $0x2f0] sm:$0xff]
        %v299 = vld [vmem:[#allocation5 + $0x2f8] sm:$0xff]
        %v396 = vunpack.c.l.b16 %v204
        %v397 = vunpack.c.h.b16 %v204
        %v398 = vunpack.c.l.b16 %v205
        %v399 = vunpack.c.h.b16 %v205
        %v400 = vunpack.c.l.b16 %v206
        %v401 = vunpack.c.h.b16 %v206
        %v402 = vunpack.c.l.b16 %v207
        %v403 = vunpack.c.h.b16 %v207
        %v404 = vunpack.c.l.b16 %v208
        %v405 = vunpack.c.h.b16 %v208
        %v406 = vunpack.c.l.b16 %v209
        %v407 = vunpack.c.h.b16 %v209
        %v408 = vunpack.c.l.b16 %v210
        %v409 = vunpack.c.h.b16 %v210
        %v410 = vunpack.c.l.b16 %v211
        %v411 = vunpack.c.h.b16 %v211
        %v412 = vunpack.c.l.b16 %v212
        %v413 = vunpack.c.h.b16 %v212
        %v414 = vunpack.c.l.b16 %v213
        %v415 = vunpack.c.h.b16 %v213
        %v416 = vunpack.c.l.b16 %v214
        %v417 = vunpack.c.h.b16 %v214
        %v418 = vunpack.c.l.b16 %v215
        %v419 = vunpack.c.h.b16 %v215
        %v420 = vunpack.c.l.b16 %v216
        %v421 = vunpack.c.h.b16 %v216
        %v422 = vunpack.c.l.b16 %v217
        %v423 = vunpack.c.h.b16 %v217
        %v424 = vunpack.c.l.b16 %v218
        %v425 = vunpack.c.h.b16 %v218
        %v426 = vunpack.c.l.b16 %v219
        %v427 = vunpack.c.h.b16 %v219
        %v428 = vunpack.c.l.b16 %v220
        %v429 = vunpack.c.h.b16 %v220
        %v430 = vunpack.c.l.b16 %v221
        %v431 = vunpack.c.h.b16 %v221
        %v432 = vunpack.c.l.b16 %v222
        %v433 = vunpack.c.h.b16 %v222
        %v434 = vunpack.c.l.b16 %v223
        %v435 = vunpack.c.h.b16 %v223
        %v436 = vunpack.c.l.b16 %v224
        %v437 = vunpack.c.h.b16 %v224
        %v438 = vunpack.c.l.b16 %v225
        %v439 = vunpack.c.h.b16 %v225
        %v440 = vunpack.c.l.b16 %v226
        %v441 = vunpack.c.h.b16 %v226
        %v442 = vunpack.c.l.b16 %v227
        %v443 = vunpack.c.h.b16 %v227
        %v444 = vunpack.c.l.b16 %v228
        %v445 = vunpack.c.h.b16 %v228
        %v446 = vunpack.c.l.b16 %v229
        %v447 = vunpack.c.h.b16 %v229
        %v448 = vunpack.c.l.b16 %v230
        %v449 = vunpack.c.h.b16 %v230
        %v450 = vunpack.c.l.b16 %v231
        %v451 = vunpack.c.h.b16 %v231
        %v452 = vunpack.c.l.b16 %v232
        %v453 = vunpack.c.h.b16 %v232
        %v454 = vunpack.c.l.b16 %v233
        %v455 = vunpack.c.h.b16 %v233
        %v456 = vunpack.c.l.b16 %v234
        %v457 = vunpack.c.h.b16 %v234
        %v458 = vunpack.c.l.b16 %v235
        %v459 = vunpack.c.h.b16 %v235
        %v460 = vunpack.c.l.b16 %v236
        %v461 = vunpack.c.h.b16 %v236
        %v462 = vunpack.c.l.b16 %v237
        %v463 = vunpack.c.h.b16 %v237
        %v464 = vunpack.c.l.b16 %v238
        %v465 = vunpack.c.h.b16 %v238
        %v466 = vunpack.c.l.b16 %v239
        %v467 = vunpack.c.h.b16 %v239
        %v468 = vunpack.c.l.b16 %v240
        %v469 = vunpack.c.h.b16 %v240
        %v470 = vunpack.c.l.b16 %v241
        %v471 = vunpack.c.h.b16 %v241
        %v472 = vunpack.c.l.b16 %v242
        %v473 = vunpack.c.h.b16 %v242
        %v474 = vunpack.c.l.b16 %v243
        %v475 = vunpack.c.h.b16 %v243
        %v476 = vunpack.c.l.b16 %v244
        %v477 = vunpack.c.h.b16 %v244
        %v478 = vunpack.c.l.b16 %v245
        %v479 = vunpack.c.h.b16 %v245
        %v480 = vunpack.c.l.b16 %v246
        %v481 = vunpack.c.h.b16 %v246
        %v482 = vunpack.c.l.b16 %v247
        %v483 = vunpack.c.h.b16 %v247
        %v484 = vunpack.c.l.b16 %v248
        %v485 = vunpack.c.h.b16 %v248
        %v486 = vunpack.c.l.b16 %v249
        %v487 = vunpack.c.h.b16 %v249
        %v488 = vunpack.c.l.b16 %v250
        %v489 = vunpack.c.h.b16 %v250
        %v490 = vunpack.c.l.b16 %v251
        %v491 = vunpack.c.h.b16 %v251
        %v492 = vunpack.c.l.b16 %v252
        %v493 = vunpack.c.h.b16 %v252
        %v494 = vunpack.c.l.b16 %v253
        %v495 = vunpack.c.h.b16 %v253
        %v496 = vunpack.c.l.b16 %v254
        %v497 = vunpack.c.h.b16 %v254
        %v498 = vunpack.c.l.b16 %v255
        %v499 = vunpack.c.h.b16 %v255
        %v500 = vunpack.c.l.b16 %v256
        %v501 = vunpack.c.h.b16 %v256
        %v502 = vunpack.c.l.b16 %v257
        %v503 = vunpack.c.h.b16 %v257
        %v504 = vunpack.c.l.b16 %v258
        %v505 = vunpack.c.h.b16 %v258
        %v506 = vunpack.c.l.b16 %v259
        %v507 = vunpack.c.h.b16 %v259
        %v508 = vunpack.c.l.b16 %v260
        %v509 = vunpack.c.h.b16 %v260
        %v510 = vunpack.c.l.b16 %v261
        %v511 = vunpack.c.h.b16 %v261
        %v512 = vunpack.c.l.b16 %v262
        %v513 = vunpack.c.h.b16 %v262
        %v514 = vunpack.c.l.b16 %v263
        %v515 = vunpack.c.h.b16 %v263
        %v516 = vunpack.c.l.b16 %v264
        %v517 = vunpack.c.h.b16 %v264
        %v518 = vunpack.c.l.b16 %v265
        %v519 = vunpack.c.h.b16 %v265
        %v520 = vunpack.c.l.b16 %v266
        %v521 = vunpack.c.h.b16 %v266
        %v522 = vunpack.c.l.b16 %v267
        %v523 = vunpack.c.h.b16 %v267
        %v524 = vunpack.c.l.b16 %v268
        %v525 = vunpack.c.h.b16 %v268
        %v526 = vunpack.c.l.b16 %v269
        %v527 = vunpack.c.h.b16 %v269
        %v528 = vunpack.c.l.b16 %v270
        %v529 = vunpack.c.h.b16 %v270
        %v530 = vunpack.c.l.b16 %v271
        %v531 = vunpack.c.h.b16 %v271
        %v532 = vunpack.c.l.b16 %v272
        %v533 = vunpack.c.h.b16 %v272
        %v534 = vunpack.c.l.b16 %v273
        %v535 = vunpack.c.h.b16 %v273
        %v536 = vunpack.c.l.b16 %v274
        %v537 = vunpack.c.h.b16 %v274
        %v538 = vunpack.c.l.b16 %v275
        %v539 = vunpack.c.h.b16 %v275
        %v540 = vunpack.c.l.b16 %v276
        %v541 = vunpack.c.h.b16 %v276
        %v542 = vunpack.c.l.b16 %v277
        %v543 = vunpack.c.h.b16 %v277
        %v544 = vunpack.c.l.b16 %v278
        %v545 = vunpack.c.h.b16 %v278
        %v546 = vunpack.c.l.b16 %v279
        %v547 = vunpack.c.h.b16 %v279
        %v548 = vunpack.c.l.b16 %v280
        %v549 = vunpack.c.h.b16 %v280
        %v550 = vunpack.c.l.b16 %v281
        %v551 = vunpack.c.h.b16 %v281
        %v552 = vunpack.c.l.b16 %v282
        %v553 = vunpack.c.h.b16 %v282
        %v554 = vunpack.c.l.b16 %v283
        %v555 = vunpack.c.h.b16 %v283
        %v556 = vunpack.c.l.b16 %v284
        %v557 = vunpack.c.h.b16 %v284
        %v558 = vunpack.c.l.b16 %v285
        %v559 = vunpack.c.h.b16 %v285
        %v560 = vunpack.c.l.b16 %v286
        %v561 = vunpack.c.h.b16 %v286
        %v562 = vunpack.c.l.b16 %v287
        %v563 = vunpack.c.h.b16 %v287
        %v564 = vunpack.c.l.b16 %v288
        %v565 = vunpack.c.h.b16 %v288
        %v566 = vunpack.c.l.b16 %v289
        %v567 = vunpack.c.h.b16 %v289
        %v568 = vunpack.c.l.b16 %v290
        %v569 = vunpack.c.h.b16 %v290
        %v570 = vunpack.c.l.b16 %v291
        %v571 = vunpack.c.h.b16 %v291
        %v572 = vunpack.c.l.b16 %v292
        %v573 = vunpack.c.h.b16 %v292
        %v574 = vunpack.c.l.b16 %v293
        %v575 = vunpack.c.h.b16 %v293
        %v576 = vunpack.c.l.b16 %v294
        %v577 = vunpack.c.h.b16 %v294
        %v578 = vunpack.c.l.b16 %v295
        %v579 = vunpack.c.h.b16 %v295
        %v580 = vunpack.c.l.b16 %v296
        %v581 = vunpack.c.h.b16 %v296
        %v582 = vunpack.c.l.b16 %v297
        %v583 = vunpack.c.h.b16 %v297
        %v584 = vunpack.c.l.b16 %v298
        %v585 = vunpack.c.h.b16 %v298
        %v586 = vunpack.c.l.b16 %v299
        %v587 = vunpack.c.h.b16 %v299
        %v588 = vpack.c.b16 %v402, %v396
        %v589 = vpack.c.b16 %v403, %v397
        %v590 = vpack.c.b16 %v404, %v398
        %v591 = vpack.c.b16 %v405, %v399
        %v592 = vpack.c.b16 %v406, %v400
        %v593 = vpack.c.b16 %v407, %v401
        %v594 = vpack.c.b16 %v414, %v408
        %v595 = vpack.c.b16 %v415, %v409
        %v596 = vpack.c.b16 %v416, %v410
        %v597 = vpack.c.b16 %v417, %v411
        %v598 = vpack.c.b16 %v418, %v412
        %v599 = vpack.c.b16 %v419, %v413
        %v600 = vpack.c.b16 %v426, %v420
        %v601 = vpack.c.b16 %v427, %v421
        %v602 = vpack.c.b16 %v428, %v422
        %v603 = vpack.c.b16 %v429, %v423
        %v604 = vpack.c.b16 %v430, %v424
        %v605 = vpack.c.b16 %v431, %v425
        %v606 = vpack.c.b16 %v438, %v432
        %v607 = vpack.c.b16 %v439, %v433
        %v608 = vpack.c.b16 %v440, %v434
        %v609 = vpack.c.b16 %v441, %v435
        %v610 = vpack.c.b16 %v442, %v436
        %v611 = vpack.c.b16 %v443, %v437
        %v612 = vpack.c.b16 %v450, %v444
        %v613 = vpack.c.b16 %v451, %v445
        %v614 = vpack.c.b16 %v452, %v446
        %v615 = vpack.c.b16 %v453, %v447
        %v616 = vpack.c.b16 %v454, %v448
        %v617 = vpack.c.b16 %v455, %v449
        %v618 = vpack.c.b16 %v462, %v456
        %v619 = vpack.c.b16 %v463, %v457
        %v620 = vpack.c.b16 %v464, %v458
        %v621 = vpack.c.b16 %v465, %v459
        %v622 = vpack.c.b16 %v466, %v460
        %v623 = vpack.c.b16 %v467, %v461
        %v624 = vpack.c.b16 %v474, %v468
        %v625 = vpack.c.b16 %v475, %v469
        %v626 = vpack.c.b16 %v476, %v470
        %v627 = vpack.c.b16 %v477, %v471
        %v628 = vpack.c.b16 %v478, %v472
        %v629 = vpack.c.b16 %v479, %v473
        %v630 = vpack.c.b16 %v486, %v480
        %v631 = vpack.c.b16 %v487, %v481
        %v632 = vpack.c.b16 %v488, %v482
        %v633 = vpack.c.b16 %v489, %v483
        %v634 = vpack.c.b16 %v490, %v484
        %v635 = vpack.c.b16 %v491, %v485
        %v636 = vpack.c.b16 %v498, %v492
        %v637 = vpack.c.b16 %v499, %v493
        %v638 = vpack.c.b16 %v500, %v494
        %v639 = vpack.c.b16 %v501, %v495
        %v640 = vpack.c.b16 %v502, %v496
        %v641 = vpack.c.b16 %v503, %v497
        %v642 = vpack.c.b16 %v510, %v504
        %v643 = vpack.c.b16 %v511, %v505
        %v644 = vpack.c.b16 %v512, %v506
        %v645 = vpack.c.b16 %v513, %v507
        %v646 = vpack.c.b16 %v514, %v508
        %v647 = vpack.c.b16 %v515, %v509
        %v648 = vpack.c.b16 %v522, %v516
        %v649 = vpack.c.b16 %v523, %v517
        %v650 = vpack.c.b16 %v524, %v518
        %v651 = vpack.c.b16 %v525, %v519
        %v652 = vpack.c.b16 %v526, %v520
        %v653 = vpack.c.b16 %v527, %v521
        %v654 = vpack.c.b16 %v534, %v528
        %v655 = vpack.c.b16 %v535, %v529
        %v656 = vpack.c.b16 %v536, %v530
        %v657 = vpack.c.b16 %v537, %v531
        %v658 = vpack.c.b16 %v538, %v532
        %v659 = vpack.c.b16 %v539, %v533
        %v660 = vpack.c.b16 %v546, %v540
        %v661 = vpack.c.b16 %v547, %v541
        %v662 = vpack.c.b16 %v548, %v542
        %v663 = vpack.c.b16 %v549, %v543
        %v664 = vpack.c.b16 %v550, %v544
        %v665 = vpack.c.b16 %v551, %v545
        %v666 = vpack.c.b16 %v558, %v552
        %v667 = vpack.c.b16 %v559, %v553
        %v668 = vpack.c.b16 %v560, %v554
        %v669 = vpack.c.b16 %v561, %v555
        %v670 = vpack.c.b16 %v562, %v556
        %v671 = vpack.c.b16 %v563, %v557
        %v672 = vpack.c.b16 %v570, %v564
        %v673 = vpack.c.b16 %v571, %v565
        %v674 = vpack.c.b16 %v572, %v566
        %v675 = vpack.c.b16 %v573, %v567
        %v676 = vpack.c.b16 %v574, %v568
        %v677 = vpack.c.b16 %v575, %v569
        %v678 = vpack.c.b16 %v582, %v576
        %v679 = vpack.c.b16 %v583, %v577
        %v680 = vpack.c.b16 %v584, %v578
        %v681 = vpack.c.b16 %v585, %v579
        %v682 = vpack.c.b16 %v586, %v580
        %v683 = vpack.c.b16 %v587, %v581
        %780 = vmatprep.subr.bf16.mxu0 %v631
        %781 = vmatpush1.bf16.msra.mxu0 %v630
        %782 = vmatprep.subr.bf16.mxu0 %v625
        %783 = vmatpush1.bf16.msra.mxu0 %v624
        %784 = vmatprep.subr.bf16.mxu0 %v619
        %785 = vmatpush1.bf16.msra.mxu0 %v618
        %786 = vmatprep.subr.bf16.mxu0 %v613
        %787 = vmatpush1.bf16.msra.mxu0 %v612
        %788 = vmatprep.subr.bf16.mxu0 %v607
        %789 = vmatpush1.bf16.msra.mxu0 %v606
        %790 = vmatprep.subr.bf16.mxu0 %v601
        %791 = vmatpush1.bf16.msra.mxu0 %v600
        %792 = vmatprep.subr.bf16.mxu0 %v595
        %793 = vmatpush1.bf16.msra.mxu0 %v594
        %794 = vmatprep.subr.bf16.mxu0 %v589
        %795 = vmatpush1.bf16.msra.mxu0 %v588
        %796 = vmatprep.subr.bf16.mxu0 %v679
        %797 = vmatpush2.bf16.msra.mxu0 %v678
        %798 = vmatprep.subr.bf16.mxu0 %v673
        %799 = vmatpush2.bf16.msra.mxu0 %v672
        %800 = vmatprep.subr.bf16.mxu0 %v667
        %801 = vmatpush2.bf16.msra.mxu0 %v666
        %802 = vmatprep.subr.bf16.mxu0 %v661
        %803 = vmatpush2.bf16.msra.mxu0 %v660
        %804 = vmatprep.subr.bf16.mxu0 %v655
        %805 = vmatpush2.bf16.msra.mxu0 %v654
        %806 = vmatprep.subr.bf16.mxu0 %v649
        %807 = vmatpush2.bf16.msra.mxu0 %v648
        %808 = vmatprep.subr.bf16.mxu0 %v643
        %809 = vmatpush2.bf16.msra.mxu0 %v642
        %810 = vmatprep.subr.bf16.mxu0 %v637
        %811 = vmatpush2.bf16.msra.mxu0 %v636
        %812 = vmatprep.mubr.bf16.mxu0 %v203
        %813 = vmatmul.mubr.bf16.gmra.mxu0 %v202
        %v814 = vpop.f32.mrf.mxu0
        %v815 = vadd.f32 0.0, %v814
        %v816 = vpop.f32.mrf.mxu0
        %v817 = vadd.f32 0.0, %v816
        %v818 = vpop.f32.mrf.mxu0
        %v819 = vadd.f32 0.0, %v818
        %v820 = vpop.f32.mrf.mxu0
        %v821 = vadd.f32 0.0, %v820
        %822 = vdwg.mxu0
        %823 = vmatprep.subr.bf16.mxu0 %v633
        %824 = vmatpush1.bf16.msra.mxu0 %v632
        %825 = vmatprep.subr.bf16.mxu0 %v627
        %826 = vmatpush1.bf16.msra.mxu0 %v626
        %827 = vmatprep.subr.bf16.mxu0 %v621
        %828 = vmatpush1.bf16.msra.mxu0 %v620
        %829 = vmatprep.subr.bf16.mxu0 %v615
        %830 = vmatpush1.bf16.msra.mxu0 %v614
        %831 = vmatprep.subr.bf16.mxu0 %v609
        %832 = vmatpush1.bf16.msra.mxu0 %v608
        %833 = vmatprep.subr.bf16.mxu0 %v603
        %834 = vmatpush1.bf16.msra.mxu0 %v602
        %835 = vmatprep.subr.bf16.mxu0 %v597
        %836 = vmatpush1.bf16.msra.mxu0 %v596
        %837 = vmatprep.subr.bf16.mxu0 %v591
        %838 = vmatpush1.bf16.msra.mxu0 %v590
        %839 = vmatprep.subr.bf16.mxu0 %v681
        %840 = vmatpush2.bf16.msra.mxu0 %v680
        %841 = vmatprep.subr.bf16.mxu0 %v675
        %842 = vmatpush2.bf16.msra.mxu0 %v674
        %843 = vmatprep.subr.bf16.mxu0 %v669
        %844 = vmatpush2.bf16.msra.mxu0 %v668
        %845 = vmatprep.subr.bf16.mxu0 %v663
        %846 = vmatpush2.bf16.msra.mxu0 %v662
        %847 = vmatprep.subr.bf16.mxu0 %v657
        %848 = vmatpush2.bf16.msra.mxu0 %v656
        %849 = vmatprep.subr.bf16.mxu0 %v651
        %850 = vmatpush2.bf16.msra.mxu0 %v650
        %851 = vmatprep.subr.bf16.mxu0 %v645
        %852 = vmatpush2.bf16.msra.mxu0 %v644
        %853 = vmatprep.subr.bf16.mxu0 %v639
        %854 = vmatpush2.bf16.msra.mxu0 %v638
        %855 = vmatprep.mubr.bf16.mxu0 %v203
        %856 = vmatmul.mubr.bf16.gmra.mxu0 %v202
        %v857 = vpop.f32.mrf.mxu0
        %v858 = vadd.f32 0.0, %v857
        %v859 = vpop.f32.mrf.mxu0
        %v860 = vadd.f32 0.0, %v859
        %v861 = vpop.f32.mrf.mxu0
        %v862 = vadd.f32 0.0, %v861
        %v863 = vpop.f32.mrf.mxu0
        %v864 = vadd.f32 0.0, %v863
        %865 = vdwg.mxu0
        %866 = vmatprep.subr.bf16.mxu0 %v635
        %867 = vmatpush1.bf16.msra.mxu0 %v634
        %868 = vmatprep.subr.bf16.mxu0 %v629
        %869 = vmatpush1.bf16.msra.mxu0 %v628
        %870 = vmatprep.subr.bf16.mxu0 %v623
        %871 = vmatpush1.bf16.msra.mxu0 %v622
        %872 = vmatprep.subr.bf16.mxu0 %v617
        %873 = vmatpush1.bf16.msra.mxu0 %v616
        %874 = vmatprep.subr.bf16.mxu0 %v611
        %875 = vmatpush1.bf16.msra.mxu0 %v610
        %876 = vmatprep.subr.bf16.mxu0 %v605
        %877 = vmatpush1.bf16.msra.mxu0 %v604
        %878 = vmatprep.subr.bf16.mxu0 %v599
        %879 = vmatpush1.bf16.msra.mxu0 %v598
        %880 = vmatprep.subr.bf16.mxu0 %v593
        %881 = vmatpush1.bf16.msra.mxu0 %v592
        %882 = vmatprep.subr.bf16.mxu0 %v683
        %883 = vmatpush2.bf16.msra.mxu0 %v682
        %884 = vmatprep.subr.bf16.mxu0 %v677
        %885 = vmatpush2.bf16.msra.mxu0 %v676
        %886 = vmatprep.subr.bf16.mxu0 %v671
        %887 = vmatpush2.bf16.msra.mxu0 %v670
        %888 = vmatprep.subr.bf16.mxu0 %v665
        %889 = vmatpush2.bf16.msra.mxu0 %v664
        %890 = vmatprep.subr.bf16.mxu0 %v659
        %891 = vmatpush2.bf16.msra.mxu0 %v658
        %892 = vmatprep.subr.bf16.mxu0 %v653
        %893 = vmatpush2.bf16.msra.mxu0 %v652
        %894 = vmatprep.subr.bf16.mxu0 %v647
        %895 = vmatpush2.bf16.msra.mxu0 %v646
        %896 = vmatprep.subr.bf16.mxu0 %v641
        %897 = vmatpush2.bf16.msra.mxu0 %v640
        %898 = vmatprep.mubr.bf16.mxu0 %v203
        %899 = vmatmul.mubr.bf16.gmra.mxu0 %v202
        %v900 = vpop.f32.mrf.mxu0
        %v901 = vadd.f32 0.0, %v900
        %v902 = vpop.f32.mrf.mxu0
        %v903 = vadd.f32 0.0, %v902
        %v904 = vpop.f32.mrf.mxu0
        %v905 = vadd.f32 0.0, %v904
        %v906 = vpop.f32.mrf.mxu0
        %v907 = vadd.f32 0.0, %v906
        %908 = vdwg.mxu0
        %v909 = vpack.c.bf16 %v819, %v815
        %v910 = vpack.c.bf16 %v821, %v817
        %v911 = vpack.c.bf16 %v862, %v858
        %v912 = vpack.c.bf16 %v864, %v860
        %v913 = vpack.c.bf16 %v905, %v901
        %v914 = vpack.c.bf16 %v907, %v903
        %v921 = vunpack.c.l.b16 %v909
        %v922 = vunpack.c.l.b16 %v910
        %v923 = vunpack.c.l.b16 %v911
        %v924 = vunpack.c.l.b16 %v912
        %v925 = vunpack.c.l.b16 %v913
        %v926 = vunpack.c.l.b16 %v914
        %v927 = vunpack.c.h.b16 %v909
        %v928 = vunpack.c.h.b16 %v910
        %v929 = vunpack.c.h.b16 %v911
        %v930 = vunpack.c.h.b16 %v912
        %v931 = vunpack.c.h.b16 %v913
        %v932 = vunpack.c.h.b16 %v914
        %v933 = vpack.c.b16 %v922, %v921
        %v934 = vpack.c.b16 %v924, %v923
        %v935 = vpack.c.b16 %v926, %v925
        %v936 = vpack.c.b16 %v928, %v927
        %v937 = vpack.c.b16 %v930, %v929
        %v938 = vpack.c.b16 %v932, %v931
        %945 = vst [vmem:[%s195] sm:$0xff] %v933
        %946 = vst [vmem:[%s195 + $0x8] sm:$0xff] %v934
        %947 = vst [vmem:[%s195 + $0x10] sm:$0xff] %v935
        %948 = vst [vmem:[%s195 + $0x18] sm:$0xff] %v936
        %949 = vst [vmem:[%s195 + $0x20] sm:$0xff] %v937
        %950 = vst [vmem:[%s195 + $0x28] sm:$0xff] %v938
        %s951 = sand.u32 %s91, 1
        %s952 = scalar_lea.sflag [#allocation4], %s951
        %s953 = sand.u32 %s91, 1
        %s954 = smul.addr %s953, 48
        %s955 = scalar_lea.vmem [#allocation7], %s954
        // Predicated region
        $region37: #{tpu_custom_call.1} parent=27 // pred_check
          %p956 = pneg %p101
        $region38: #{tpu_custom_call.1} parent=27 // pred_check_branch
          %958 = sbr.rel (%p956) target = $region40
        $region39: #{tpu_custom_call.1} parent=27 // pred_region
          %s959 = smul.u32 2, %s25
          %s961 = ssub.s32 768, 768
          %962 = vsyncadd %s952, %s961
          %s963 = smul.addr %s959, 6
          %s964 = smul.addr %s24, 12
          %s965 = sadd.s32 %s963, %s964
          %s966 = smul.addr %s965, 64
          %s967 = scalar_lea.hbm %s2, %s966
          %s968 = sshll.u32 %s955, 4
          %s969 = int_to_ptr.vmem [resolvable:$true] %s968
          %974 = dma.vmem_to_hbm [thread:$0]  %s969, 768, %s967, %s952, 384, 384, 24
        $region40: #{tpu_custom_call.1} parent=27 // pred_fallthru
          _
      $region28: #{tpu_custom_call.1} parent=5 // pred_fallthru
        _
      %p975 = scmp.le.s32.totalorder 2, %s15
      // Predicated region
      $region41: #{tpu_custom_call.1} parent=5 // pred_check
        %p976 = pneg %p975
      $region42: #{tpu_custom_call.1} parent=5 // pred_check_branch
        %978 = sbr.rel (%p976) target = $region44
      $region43: #{tpu_custom_call.1} parent=5 // pred_region
        %s979 = ssub.s32 %s15, 2
        // Predicated region
        $region45: #{tpu_custom_call.1} parent=43 // pred_check
          %p980 = pneg %p107
        $region46: #{tpu_custom_call.1} parent=43 // pred_check_branch
          %982 = sbr.rel (%p980) target = $region48
        $region47: #{tpu_custom_call.1} parent=43 // pred_region
          %s983 = sand.u32 %s92, 1
          %s984 = scalar_lea.sflag [#allocation4], %s983
          %s985 = sand.u32 %s92, 1
          %s986 = smul.addr %s985, 48
          %s987 = scalar_lea.vmem [#allocation7], %s986
          %988 = dma.done %s984, 768
        $region48: #{tpu_custom_call.1} parent=43 // pred_fallthru
          _
      $region44: #{tpu_custom_call.1} parent=5 // pred_fallthru
        _
    $region6: #{tpu_custom_call.1} parent=1 // loop_footer
      %s19 = sadd.s32 1, %s15
    $region7: #{tpu_custom_call.1} parent=1 // loop_footer_branch
      %14 = sbr.rel target = $region3
    $region8: #{tpu_custom_call.1} parent=1 // loop_exit
      _
    %989 = vsyncpa [#allocation3], 1
    %s990 = scalar_lea.sflag [#allocation3], 1
    %991 = vsyncpa %s990, 1
    %992 = vsyncpa [#allocation6], 1
    %993 = vsyncpa [#allocation4], 1
    %s994 = scalar_lea.sflag [#allocation4], 1
    %995 = vsyncpa %s994, 1

</llo_original>
